<compile_context>
chip_gen: v5e
topology: v5e:2x2
jax: 0.10.0
libtpu: 0.0.40
codegen_flags: <defaults>
</compile_context>

<pallas_src>
import jax
import jax.numpy as jnp
from jax.experimental import pallas as pl
from jax.experimental.pallas import tpu as pltpu

_LANE = 128
_SUBLANE = 8
_TARGET_BLOCK_BYTES = 2 * 1024 * 1024   # ~2 MiB blocks
_MIN_BLOCK_BYTES = 512 * 1024           # don't shrink below this for more steps
_MIN_GRID_STEPS = 8                     # keep pipeline / both v7x TCs busy


def _split_lane(total):
    """Split `total` into (rows, lanes): lanes a multiple of 128, rows >= 8 when
    the size allows, so blocks are (8,128)-dense.  `total` must be a multiple
    of 128 (the wrappers pad to guarantee this)."""
    candidates = [L for L in (1024, 512, 256, 128) if total % L == 0]
    for lanes in candidates:                      # widest lane axis first
        if total // lanes >= _SUBLANE:
            return total // lanes, lanes
    lanes = candidates[-1]                        # tiny input: maximize rows
    return total // lanes, lanes


def _pick_tile_rows(rows, lanes, itemsize):
    """Rows per block: ~2 MiB blocks, >= ~8 grid steps when that still leaves
    >= 512 KiB blocks; multiple of 8 (or the full row count)."""
    row_bytes = lanes * itemsize
    tile = _TARGET_BLOCK_BYTES // row_bytes
    steps_tile = max(_MIN_BLOCK_BYTES // row_bytes, rows // _MIN_GRID_STEPS)
    tile = max(1, min(tile, steps_tile))
    tile = max(_SUBLANE, (tile // _SUBLANE) * _SUBLANE)
    return rows if rows <= tile else tile


def _kernel_c1(alpha_ref, x_ref, o_ref):
    # sp = softplus(relu(alpha) * x); out = sp / (1 + sp)
    a = jnp.maximum(alpha_ref[0], 0.0)
    u = a * x_ref[...].astype(jnp.float32)
    sp = jnp.logaddexp(u, 0.0)                     # numerically stable softplus
    o_ref[...] = (sp / (1.0 + sp)).astype(o_ref.dtype)


def _kernel_c2(alpha_ref, x0_ref, x1_ref, o_ref):
    # softmax over 2 channels, keep channel 1  ==  sigmoid(u1 - u0)
    a = jnp.maximum(alpha_ref[0], 0.0)
    d = x1_ref[...].astype(jnp.float32) - x0_ref[...].astype(jnp.float32)
    o_ref[...] = jax.nn.sigmoid(a * d).astype(o_ref.dtype)


def _forward_c1(alpha, x):
    n, _, h, w = x.shape
    total = n * h * w
    flat = x.reshape(total)
    pad = (-total) % _LANE
    if pad:
        # TODO(synk): non-128-multiple sizes cost one extra copy for lane padding.
        flat = jnp.pad(flat, (0, pad))
    rows, lanes = _split_lane(total + pad)
    slab = flat.reshape(rows, lanes)
    tile_rows = _pick_tile_rows(rows, lanes, jnp.dtype(x.dtype).itemsize)
    spec = pl.BlockSpec((tile_rows, lanes), lambda i: (i, 0))
    out = pl.pallas_call(
        _kernel_c1,
        out_shape=jax.ShapeDtypeStruct((rows, lanes), x.dtype),
        grid=(pl.cdiv(rows, tile_rows),),
        in_specs=[pl.BlockSpec(memory_space=pltpu.MemorySpace.SMEM), spec],
        out_specs=spec,
        compiler_params=pltpu.CompilerParams(dimension_semantics=("parallel",)),
    )(alpha, slab)
    out_flat = out.reshape(rows * lanes)
    if pad:
        out_flat = out_flat[:total]
    return out_flat.reshape(n, 1, h, w)


def _forward_c2(alpha, x):
    n, _, h, w = x.shape
    hw = h * w
    xr = x.reshape(n, 2, hw)                       # free contiguous reshape
    pad = (-hw) % _LANE
    if pad:
        # TODO(synk): non-128-multiple H*W pads the lane axis (one extra copy).
        xr = jnp.pad(xr, ((0, 0), (0, 0), (0, pad)))
    hw_p = hw + pad
    rows, lanes = _split_lane(hw_p)
    x4 = xr.reshape(n, 2, rows, lanes)             # free contiguous reshape
    tile_rows = _pick_tile_rows(rows, lanes, jnp.dtype(x.dtype).itemsize)
    ch_block = (pl.Squeezed(), pl.Squeezed(), tile_rows, lanes)
    out = pl.pallas_call(
        _kernel_c2,
        out_shape=jax.ShapeDtypeStruct((n, rows, lanes), x.dtype),
        grid=(n, pl.cdiv(rows, tile_rows)),
        in_specs=[
            pl.BlockSpec(memory_space=pltpu.MemorySpace.SMEM),    # alpha scalar
            pl.BlockSpec(ch_block, lambda b, r: (b, 0, r, 0)),    # channel 0
            pl.BlockSpec(ch_block, lambda b, r: (b, 1, r, 0)),    # channel 1
        ],
        out_specs=pl.BlockSpec((pl.Squeezed(), tile_rows, lanes),
                               lambda b, r: (b, r, 0)),
        compiler_params=pltpu.CompilerParams(
            dimension_semantics=("parallel", "parallel")),
    )(alpha, x4, x4)
    out2 = out.reshape(n, hw_p)
    if pad:
        out2 = out2[:, :hw]
    return out2.reshape(n, 1, h, w)


def densemap_guided_forward(alpha, x):
    """alpha: (1,) float32 parameter; x: (N, C, H, W) with C in {1, 2}."""
    c = x.shape[1]
    if c == 1:
        return _forward_c1(alpha, x)
    if c == 2:
        return _forward_c2(alpha, x)
    raise ValueError("densemap_guided expects 1 or 2 channels")


def _reference(alpha, x):
    a = jnp.maximum(alpha[0], 0.0)
    u = a * x
    if x.shape[1] == 1:
        sp = jnp.logaddexp(u, 0.0)
        return sp / (1.0 + sp)
    return jax.nn.softmax(u, axis=1)[:, 1:2]


if __name__ == "__main__":
    key = jax.random.PRNGKey(0)
    k_alpha, k1, k2, k3, k4 = jax.random.split(key, 5)

    # deterministic parameter init (matches nn.Parameter(torch.randn(1)) shape)
    alpha = jax.random.normal(k_alpha, (1,), dtype=jnp.float32)

    # 2-channel case (softmax over channels, take channel 1)
    x2 = jax.random.normal(k1, (2, 2, 16, 16), dtype=jnp.float32)
    out2 = jax.block_until_ready(densemap_guided_forward(alpha, x2))
    assert out2.shape == (2, 1, 16, 16)
    assert jnp.allclose(out2, _reference(alpha, x2), atol=1e-5, rtol=1e-5)

    # 1-channel case (softplus gate) -- exact math now, tight tolerance
    x1 = jax.random.normal(k2, (2, 1, 16, 16), dtype=jnp.float32)
    out1 = jax.block_until_ready(densemap_guided_forward(alpha, x1))
    assert out1.shape == (2, 1, 16, 16)
    assert jnp.allclose(out1, _reference(alpha, x1), atol=1e-5, rtol=1e-5)

    # non-128-multiple spatial sizes exercise the lane-padding paths
    x2p = jax.random.normal(k3, (2, 2, 24, 24), dtype=jnp.float32)   # H*W = 576
    out2p = jax.block_until_ready(densemap_guided_forward(alpha, x2p))
    assert out2p.shape == (2, 1, 24, 24)
    assert jnp.allclose(out2p, _reference(alpha, x2p), atol=1e-5, rtol=1e-5)

    x1p = jax.random.normal(k4, (3, 1, 10, 13), dtype=jnp.float32)   # total = 390
    out1p = jax.block_until_ready(densemap_guided_forward(alpha, x1p))
    assert out1p.shape == (3, 1, 10, 13)
    assert jnp.allclose(out1p, _reference(alpha, x1p), atol=1e-5, rtol=1e-5)

    print("KERNEL_OK")
</pallas_src>

<mosaic_0001>
module attributes {stable_mosaic.version = 11 : i64} {
  func.func @_kernel_c2(%arg0: i32, %arg1: i32, %arg2: memref<1xf32, #tpu.memory_space<smem>>, %arg3: memref<1x1x2x128xf32, #tpu.memory_space<vmem>>, %arg4: memref<1x1x2x128xf32, #tpu.memory_space<vmem>>, %arg5: memref<1x2x128xf32, #tpu.memory_space<vmem>>) attributes {dimension_semantics = [#tpu.dimension_semantics<parallel>, #tpu.dimension_semantics<parallel>], iteration_bounds = array<i64: 2, 1>, scalar_prefetch = 0 : i64, scratch_operands = 0 : i64, tpu.core_type = #tpu.core_type<tc>, window_params = [{transform_indices = @transform_0, window_bounds = array<i64: 1>}, {transform_indices = @transform_1, window_bounds = array<i64: 1, 1, 2, 128>}, {transform_indices = @transform_2, window_bounds = array<i64: 1, 1, 2, 128>}, {transform_indices = @transform_3, window_bounds = array<i64: 1, 2, 128>}]} {
    %c0 = arith.constant 0 : index
    %0 = memref.load %arg2[%c0] : memref<1xf32, #tpu.memory_space<smem>>
    %cst = arith.constant 0.000000e+00 : f32
    %1 = arith.maximumf %0, %cst : f32
    %c0_0 = arith.constant 0 : index
    %c0_1 = arith.constant 0 : index
    %c0_2 = arith.constant 0 : index
    %c0_3 = arith.constant 0 : index
    %2 = vector.load %arg4[%c0_0, %c0_1, %c0_2, %c0_3] : memref<1x1x2x128xf32, #tpu.memory_space<vmem>>, vector<1x1x2x128xf32>
    %3 = vector.shape_cast %2 : vector<1x1x2x128xf32> to vector<2x128xf32>
    %c0_4 = arith.constant 0 : index
    %c0_5 = arith.constant 0 : index
    %c0_6 = arith.constant 0 : index
    %c0_7 = arith.constant 0 : index
    %4 = vector.load %arg3[%c0_4, %c0_5, %c0_6, %c0_7] : memref<1x1x2x128xf32, #tpu.memory_space<vmem>>, vector<1x1x2x128xf32>
    %5 = vector.shape_cast %4 : vector<1x1x2x128xf32> to vector<2x128xf32>
    %6 = arith.subf %3, %5 : vector<2x128xf32>
    %7 = vector.broadcast %1 : f32 to vector<2x128xf32>
    %8 = arith.mulf %7, %6 : vector<2x128xf32>
    %9 = arith.negf %8 : vector<2x128xf32>
    %10 = math.exp %9 : vector<2x128xf32>
    %cst_8 = arith.constant 1.000000e+00 : f32
    %11 = vector.broadcast %cst_8 : f32 to vector<2x128xf32>
    %12 = arith.addf %11, %10 : vector<2x128xf32>
    %13 = arith.divf %11, %12 : vector<2x128xf32>
    %c0_9 = arith.constant 0 : index
    %c0_10 = arith.constant 0 : index
    %c0_11 = arith.constant 0 : index
    %14 = vector.load %arg5[%c0_9, %c0_10, %c0_11] : memref<1x2x128xf32, #tpu.memory_space<vmem>>, vector<1x2x128xf32>
    %15 = vector.shape_cast %14 : vector<1x2x128xf32> to vector<2x128xf32>
    %16 = vector.shape_cast %13 : vector<2x128xf32> to vector<1x2x128xf32>
    tpu.vector_store %arg5[%c0_9, %c0_10, %c0_11], %16 {strides = array<i32>} : memref<1x2x128xf32, #tpu.memory_space<vmem>>, vector<1x2x128xf32>,
    return
  }
  func.func @transform_0(%arg0: i32, %arg1: i32) -> i32 {
    %c0_i32 = arith.constant 0 : i32
    %c0_i32_0 = arith.constant 0 : i32
    return %c0_i32 : i32
  }
  func.func @transform_1(%arg0: i32, %arg1: i32) -> (i32, i32, i32, i32) {
    %c0_i32 = arith.constant 0 : i32
    %c0_i32_0 = arith.constant 0 : i32
    %c0_i32_1 = arith.constant 0 : i32
    return %arg0, %c0_i32, %arg1, %c0_i32_0 : i32, i32, i32, i32
  }
  func.func @transform_2(%arg0: i32, %arg1: i32) -> (i32, i32, i32, i32) {
    %c1_i32 = arith.constant 1 : i32
    %c0_i32 = arith.constant 0 : i32
    %c0_i32_0 = arith.constant 0 : i32
    return %arg0, %c1_i32, %arg1, %c0_i32 : i32, i32, i32, i32
  }
  func.func @transform_3(%arg0: i32, %arg1: i32) -> (i32, i32, i32) {
    %c0_i32 = arith.constant 0 : i32
    %c0_i32_0 = arith.constant 0 : i32
    return %arg0, %arg1, %c0_i32 : i32, i32, i32
  }
}

</mosaic_0001>

<llo_original>
// kernel: tpu_custom_call.1
$region0: #{tpu_custom_call.1}
  #allocation0 [shape = 'u32[]', space=smem, size = 0x4, offset = 0x4, fixed_abs, tag = 'smem constant byte address 0x4 - core index']
  #allocation1 [shape = 'u32[72,128]{1,0:T(1,128)}', space=vmem, size = 0x9000, scoped, tag = 'internal scratch']
  #allocation2 [shape = 'f32[1]{0:T(128)S(6)}', space=smem, size = 0x200, scoped, tag = 'scoped memory for tpu_custom_call.1']
  %s0 = inlined_call_operand.<no memory space> [shape: f32[1], index: 0, kind: input, shape index: {}]
  %s1 = inlined_call_operand.hbm [shape: f32[2,2,2,128], index: 1, kind: input, shape index: {}]
  %s2 = inlined_call_operand.hbm [shape: f32[2,2,2,128], index: 2, kind: input, shape index: {}]
  %s3 = inlined_call_operand.hbm [shape: f32[2,2,128], index: 3, kind: output, shape index: {}]
  %s4 = sld [smem:[#allocation0]]
  $region53: #{tpu_custom_call.1} parent=0
    _
  %s6 = ssub.s32 1, %s4
  %s7 = scalar_select 0, %s6, %s4
  %8 = sst [smem:[#allocation2]] %s0
  $region1: #{tpu_custom_call.1} parent=0
    #allocation3 [shape = 'u8[2048]{0}', space=vmem, size = 0x800, scoped, tag = 'input window, operand 1']
    #allocation4 [shape = 's32[2]{0}', space=sflag, size = 0x8, scoped, tag = 'scoped memory for tpu_custom_call.1']
    #allocation5 [shape = 's32[2]{0}', space=sflag, size = 0x8, scoped, tag = 'scoped memory for tpu_custom_call.1']
    #allocation6 [shape = 'u8[2048]{0}', space=vmem, size = 0x800, scoped, tag = 'input window, operand 2']
    #allocation7 [shape = 's32[2]{0}', space=sflag, size = 0x8, scoped, tag = 'scoped memory for tpu_custom_call.1']
    #allocation8 [shape = 'u8[2048]{0}', space=vmem, size = 0x800, scoped, tag = 'output window, operand 0']
    %9 = vsyncpa [#allocation4], 0
    %s10 = scalar_lea.sflag [#allocation4], 1
    %11 = vsyncpa %s10, 0
    %12 = vsyncpa [#allocation7], 0
    %s13 = scalar_lea.sflag [#allocation7], 1
    %14 = vsyncpa %s13, 0
    %15 = vsyncpa [#allocation5], 0
    %s16 = scalar_lea.sflag [#allocation5], 1
    %17 = vsyncpa %s16, 0
    loop: start=0, step=1, limit=4
    $region2: #{tpu_custom_call.1} parent=1 // loop_pre_header
      _
    $region3: #{tpu_custom_call.1} parent=1 // loop_header
      %s19 = sphi 0, %s23
      %p20 = scmp.ge.s32.totalorder %s19, 4
      %s26 = sphi 0, %s38
      %s27 = sphi 0, %s34
      %s28 = sphi 0, %s26
      %s29 = sphi 0, %s27
      %s30 = sphi 0, %s28
      %s31 = sphi 0, %s29
      %s39 = sphi 0, %s39
      %s41 = sphi 0, %s39
      %s42 = sphi 0, %s41
      %s56 = sphi 0, %s42
      %s64 = sphi 0, %s66
      %s67 = sphi 0, %s64
      %s68 = sphi 0, %s67
      %s84 = sphi 0, %s68
      %s92 = sphi 0, %s94
      %s95 = sphi 0, %s92
      %s96 = sphi 0, %s95
      %s112 = sphi 0, %s96
      %s120 = sphi 0, %s122
      %s123 = sphi 0, %s120
      %s124 = sphi 0, %s123
      %s140 = sphi 0, %s124
    $region4: #{tpu_custom_call.1} parent=1 // loop_header_branch
      %22 = sbr.rel (%p20) target = $region8
    $region5: #{tpu_custom_call.1} parent=1 // loop_body
      %s24 = ssub.s32 %s19, 1
      %s25 = ssub.s32 %s19, 2
      %s32 = sadd.s32 1, %s27
      %p33 = scmp.ge.s32.totalorder %s32, 1
      %s34 = scalar_select %p33, 0, %s32
      %s35 = sadd.s32 1, %s26
      %s36 = scalar_select %p33, %s35, %s26
      %p37 = scmp.ge.s32.totalorder %s36, 2
      %s38 = scalar_select %p37, 0, %s36
      %s40 = sadd.s32 %s39, 1
      %p43 = scmp.eq.s32.totalorder %s19, 1
      %p44 = scmp.ne.s32.totalorder %s39, %s41
      %p45 = scmp.eq.s32.totalorder %s19, 0
      %p46 = por %p44, %p45
      %p47 = scmp.ne.s32.totalorder %s39, %s41
      %p48 = scmp.eq.s32.totalorder %s24, 1
      %p49 = por %p47, %p48
      %p50 = scmp.ne.s32.totalorder %s41, %s42
      %p51 = scmp.eq.s32.totalorder %s24, 0
      %p52 = por %p50, %p51
      %p53 = scmp.ne.s32.totalorder %s41, %s42
      %p54 = scmp.eq.s32.totalorder %s25, 1
      %p55 = por %p53, %p54
      %p57 = scmp.ne.s32.totalorder %s42, %s56
      %p58 = scmp.eq.s32.totalorder %s25, 0
      %p59 = por %p57, %p58
      %s60 = ssub.s32 %s26, %s38
      %s61 = ssub.s32 %s27, %s34
      %s62 = sor.u32 %s60, %s61
      %p63 = scmp.eq.s32.totalorder %s62, 0
      %s65 = sadd.s32 %s64, 1
      %s66 = scalar_select %p63, %s64, %s65
      %p69 = pneg %p63
      %p70 = scmp.eq.s32.totalorder %s19, 1
      %p71 = por %p69, %p70
      %p72 = scmp.ne.s32.totalorder %s64, %s67
      %p73 = scmp.eq.s32.totalorder %s19, 0
      %p74 = por %p72, %p73
      %p75 = scmp.ne.s32.totalorder %s64, %s67
      %p76 = scmp.eq.s32.totalorder %s24, 1
      %p77 = por %p75, %p76
      %p78 = scmp.ne.s32.totalorder %s67, %s68
      %p79 = scmp.eq.s32.totalorder %s24, 0
      %p80 = por %p78, %p79
      %p81 = scmp.ne.s32.totalorder %s67, %s68
      %p82 = scmp.eq.s32.totalorder %s25, 1
      %p83 = por %p81, %p82
      %p85 = scmp.ne.s32.totalorder %s68, %s84
      %p86 = scmp.eq.s32.totalorder %s25, 0
      %p87 = por %p85, %p86
      %s88 = ssub.s32 %s26, %s38
      %s89 = ssub.s32 %s27, %s34
      %s90 = sor.u32 %s88, %s89
      %p91 = scmp.eq.s32.totalorder %s90, 0
      %s93 = sadd.s32 %s92, 1
      %s94 = scalar_select %p91, %s92, %s93
      %p97 = pneg %p91
      %p98 = scmp.eq.s32.totalorder %s19, 1
      %p99 = por %p97, %p98
      %p100 = scmp.ne.s32.totalorder %s92, %s95
      %p101 = scmp.eq.s32.totalorder %s19, 0
      %p102 = por %p100, %p101
      %p103 = scmp.ne.s32.totalorder %s92, %s95
      %p104 = scmp.eq.s32.totalorder %s24, 1
      %p105 = por %p103, %p104
      %p106 = scmp.ne.s32.totalorder %s95, %s96
      %p107 = scmp.eq.s32.totalorder %s24, 0
      %p108 = por %p106, %p107
      %p109 = scmp.ne.s32.totalorder %s95, %s96
      %p110 = scmp.eq.s32.totalorder %s25, 1
      %p111 = por %p109, %p110
      %p113 = scmp.ne.s32.totalorder %s96, %s112
      %p114 = scmp.eq.s32.totalorder %s25, 0
      %p115 = por %p113, %p114
      %s116 = ssub.s32 %s26, %s38
      %s117 = ssub.s32 %s27, %s34
      %s118 = sor.u32 %s116, %s117
      %p119 = scmp.eq.s32.totalorder %s118, 0
      %s121 = sadd.s32 %s120, 1
      %s122 = scalar_select %p119, %s120, %s121
      %p125 = pneg %p119
      %p126 = scmp.eq.s32.totalorder %s19, 1
      %p127 = por %p125, %p126
      %p128 = scmp.ne.s32.totalorder %s120, %s123
      %p129 = scmp.eq.s32.totalorder %s19, 0
      %p130 = por %p128, %p129
      %p131 = scmp.ne.s32.totalorder %s120, %s123
      %p132 = scmp.eq.s32.totalorder %s24, 1
      %p133 = por %p131, %p132
      %p134 = scmp.ne.s32.totalorder %s123, %s124
      %p135 = scmp.eq.s32.totalorder %s24, 0
      %p136 = por %p134, %p135
      %p137 = scmp.ne.s32.totalorder %s123, %s124
      %p138 = scmp.eq.s32.totalorder %s25, 1
      %p139 = por %p137, %p138
      %p141 = scmp.ne.s32.totalorder %s124, %s140
      %p142 = scmp.eq.s32.totalorder %s25, 0
      %p143 = por %p141, %p142
      %p144 = scmp.le.s32.totalorder 1, %s19
      %p145 = scmp.lt.s32.totalorder %s19, 3
      %p146 = pnand %p144, %p145
      %p147 = pneg %p146
      // Predicated region
      $region9: #{tpu_custom_call.1} parent=5 // pred_check
        _
      $region10: #{tpu_custom_call.1} parent=5 // pred_check_branch
        %149 = sbr.rel (%p146) target = $region12
      $region11: #{tpu_custom_call.1} parent=5 // pred_region
        %s150 = ssub.s32 %s19, 1
        // Predicated region
        $region13: #{tpu_custom_call.1} parent=11 // pred_check
          %p151 = pneg %p52
        $region14: #{tpu_custom_call.1} parent=11 // pred_check_branch
          %153 = sbr.rel (%p151) target = $region16
        $region15: #{tpu_custom_call.1} parent=11 // pred_region
          _
        $region16: #{tpu_custom_call.1} parent=11 // pred_fallthru
          _
      $region12: #{tpu_custom_call.1} parent=5 // pred_fallthru
        _
      %p154 = scmp.lt.s32.totalorder %s19, 2
      // Predicated region
      $region17: #{tpu_custom_call.1} parent=5 // pred_check
        %p155 = pneg %p154
      $region18: #{tpu_custom_call.1} parent=5 // pred_check_branch
        %157 = sbr.rel (%p155) target = $region20
      $region19: #{tpu_custom_call.1} parent=5 // pred_region
        // Predicated region
        $region21: #{tpu_custom_call.1} parent=19 // pred_check
          %p158 = pneg %p74
        $region22: #{tpu_custom_call.1} parent=19 // pred_check_branch
          %160 = sbr.rel (%p158) target = $region24
        $region23: #{tpu_custom_call.1} parent=19 // pred_region
          %s161 = sand.u32 %s64, 1
          %s162 = scalar_lea.sflag [#allocation4], %s161
          %s163 = sand.u32 %s64, 1
          %s164 = smul.addr %s163, 2
          %s165 = scalar_lea.vmem [#allocation3], %s164
          %167 = vsyncadd %s162, 0
          %s168 = smul.addr %s26, 2
          %s169 = sadd.s32 %s27, %s168
          %s170 = smul.addr %s169, 2
          %s171 = scalar_lea.hbm %s1, %s170
          %s173 = sshll.u32 %s171, 4
          %s174 = int_to_ptr.hbm [resolvable:$true] %s173
          %s175 = sshll.u32 %s165, 4
          %s176 = int_to_ptr.vmem [resolvable:$true] %s175
          %178 = dma.hbm_to_vmem [thread:$0]  %s174, 32, %s176, %s162
        $region24: #{tpu_custom_call.1} parent=19 // pred_fallthru
          _
        // Predicated region
        $region25: #{tpu_custom_call.1} parent=19 // pred_check
          %p179 = pneg %p102
        $region26: #{tpu_custom_call.1} parent=19 // pred_check_branch
          %181 = sbr.rel (%p179) target = $region28
        $region27: #{tpu_custom_call.1} parent=19 // pred_region
          %s182 = sand.u32 %s92, 1
          %s183 = scalar_lea.sflag [#allocation7], %s182
          %s184 = sand.u32 %s92, 1
          %s185 = smul.addr %s184, 2
          %s186 = scalar_lea.vmem [#allocation6], %s185
          %188 = vsyncadd %s183, 0
          %s189 = sadd.s32 %s27, 1
          %s190 = smul.addr %s26, 2
          %s191 = sadd.s32 %s189, %s190
          %s192 = smul.addr %s191, 2
          %s193 = scalar_lea.hbm %s2, %s192
          %s195 = sshll.u32 %s193, 4
          %s196 = int_to_ptr.hbm [resolvable:$true] %s195
          %s197 = sshll.u32 %s186, 4
          %s198 = int_to_ptr.vmem [resolvable:$true] %s197
          %200 = dma.hbm_to_vmem [thread:$0]  %s196, 32, %s198, %s183
        $region28: #{tpu_custom_call.1} parent=19 // pred_fallthru
          _
      $region20: #{tpu_custom_call.1} parent=5 // pred_fallthru
        _
      %p201 = scmp.le.s32.totalorder 1, %s19
      %p202 = scmp.lt.s32.totalorder %s19, 3
      %p203 = pnand %p201, %p202
      %p204 = pneg %p203
      // Predicated region
      $region29: #{tpu_custom_call.1} parent=5 // pred_check
        _
      $region30: #{tpu_custom_call.1} parent=5 // pred_check_branch
        %206 = sbr.rel (%p203) target = $region32
      $region31: #{tpu_custom_call.1} parent=5 // pred_region
        %s207 = ssub.s32 %s19, 1
        %s208 = sand.u32 %s67, 1
        %s209 = scalar_lea.sflag [#allocation4], %s208
        %s210 = sand.u32 %s67, 1
        %s211 = smul.addr %s210, 2
        %s212 = scalar_lea.vmem [#allocation3], %s211
        // Predicated region
        $region33: #{tpu_custom_call.1} parent=31 // pred_check
          %p213 = pneg %p80
        $region34: #{tpu_custom_call.1} parent=31 // pred_check_branch
          %215 = sbr.rel (%p213) target = $region36
        $region35: #{tpu_custom_call.1} parent=31 // pred_region
          %217 = dma.done %s209, 32
        $region36: #{tpu_custom_call.1} parent=31 // pred_fallthru
          _
        %s218 = sand.u32 %s95, 1
        %s219 = scalar_lea.sflag [#allocation7], %s218
        %s220 = sand.u32 %s95, 1
        %s221 = smul.addr %s220, 2
        %s222 = scalar_lea.vmem [#allocation6], %s221
        // Predicated region
        $region37: #{tpu_custom_call.1} parent=31 // pred_check
          %p223 = pneg %p108
        $region38: #{tpu_custom_call.1} parent=31 // pred_check_branch
          %225 = sbr.rel (%p223) target = $region40
        $region39: #{tpu_custom_call.1} parent=31 // pred_region
          %227 = dma.done %s219, 32
        $region40: #{tpu_custom_call.1} parent=31 // pred_fallthru
          _
        %p228 = pneg %p52
        %p229 = pneg %p49
        %s230 = sand.u32 %s67, 1
        %s231 = scalar_lea.sflag [#allocation4], %s230
        %s232 = sand.u32 %s67, 1
        %s233 = smul.addr %s232, 2
        %s234 = scalar_lea.vmem [#allocation3], %s233
        %p235 = pneg %p80
        %p236 = pneg %p77
        %s237 = sand.u32 %s95, 1
        %s238 = scalar_lea.sflag [#allocation7], %s237
        %s239 = sand.u32 %s95, 1
        %s240 = smul.addr %s239, 2
        %s241 = scalar_lea.vmem [#allocation6], %s240
        %p242 = pneg %p108
        %p243 = pneg %p105
        %p244 = pneg %p136
        %p245 = pneg %p133
        %s246 = sand.u32 %s123, 1
        %s247 = scalar_lea.sflag [#allocation5], %s246
        %s248 = sand.u32 %s123, 1
        %s249 = smul.addr %s248, 2
        %s250 = scalar_lea.vmem [#allocation8], %s249
        %s251 = sld [smem:[#allocation2]]
        %s252 = smax.f32 %s251, 0.0
        %v253 = vld [vmem:[%s222] sm:$0x3]
        %v254 = vld [vmem:[%s212] sm:$0x3]
        %v255 = vsub.f32 %v253, %v254
        %v256 = vstv %s252
        %v257 = vmul.f32 %v256, %v255
        %v258 = vxor.u32 %v257, 2147483648
        %v259 = vmul.f32 %v258, 1.442695
        %v260 = vpow.pop %v259
        %v261 = vadd.f32 %v260, 1.0
        %v262 = vrcp.pop %v261
        %v263 = vmul.f32 %v261, %v262
        %v264 = vsub.f32 1.0, %v263
        %v265 = vmul.f32 %v262, %v264
        %v266 = vadd.f32 %v262, %v265
        %vm267 = vweird.f32 %v261
        %vm268 = vweird.f32 %v262
        %vm269 = vmor %vm267, %vm268
        %v270 = vsel %vm269, %v262, %v266
        %v271 = vand.u32 2147483647, %v261
        %vm272 = vcmp.eq.f32.partialorder %v271, 8.507059e+37
        %v273 = vand.u32 %v261, 2147483648
        %v274 = vor.u32 1.1754944e-38, %v273
        %v275 = vsel %vm272, %v274, %v270
        %v276 = vmul.f32 1.0, %v275
        %277 = vst [vmem:[%s250] sm:$0x3] %v276
        %s278 = sand.u32 %s123, 1
        %s279 = scalar_lea.sflag [#allocation5], %s278
        %s280 = sand.u32 %s123, 1
        %s281 = smul.addr %s280, 2
        %s282 = scalar_lea.vmem [#allocation8], %s281
        // Predicated region
        $region41: #{tpu_custom_call.1} parent=31 // pred_check
          %p283 = pneg %p133
        $region42: #{tpu_custom_call.1} parent=31 // pred_check_branch
          %285 = sbr.rel (%p283) target = $region44
        $region43: #{tpu_custom_call.1} parent=31 // pred_region
          %287 = vsyncadd %s279, 0
          %s288 = sadd.s32 %s29, %s28
          %s289 = smul.addr %s288, 2
          %s290 = scalar_lea.hbm %s3, %s289
          %s292 = sshll.u32 %s282, 4
          %s293 = int_to_ptr.vmem [resolvable:$true] %s292
          %s294 = sshll.u32 %s290, 4
          %s295 = int_to_ptr.hbm [resolvable:$true] %s294
          %297 = dma.vmem_to_hbm [thread:$0]  %s293, 32, %s295, %s279
        $region44: #{tpu_custom_call.1} parent=31 // pred_fallthru
          _
      $region32: #{tpu_custom_call.1} parent=5 // pred_fallthru
        _
      %p298 = scmp.le.s32.totalorder 2, %s19
      // Predicated region
      $region45: #{tpu_custom_call.1} parent=5 // pred_check
        %p299 = pneg %p298
      $region46: #{tpu_custom_call.1} parent=5 // pred_check_branch
        %301 = sbr.rel (%p299) target = $region48
      $region47: #{tpu_custom_call.1} parent=5 // pred_region
        %s302 = ssub.s32 %s19, 2
        // Predicated region
        $region49: #{tpu_custom_call.1} parent=47 // pred_check
          %p303 = pneg %p139
        $region50: #{tpu_custom_call.1} parent=47 // pred_check_branch
          %305 = sbr.rel (%p303) target = $region52
        $region51: #{tpu_custom_call.1} parent=47 // pred_region
          %s306 = sand.u32 %s124, 1
          %s307 = scalar_lea.sflag [#allocation5], %s306
          %s308 = sand.u32 %s124, 1
          %s309 = smul.addr %s308, 2
          %s310 = scalar_lea.vmem [#allocation8], %s309
          %312 = dma.done %s307, 32
        $region52: #{tpu_custom_call.1} parent=47 // pred_fallthru
          _
      $region48: #{tpu_custom_call.1} parent=5 // pred_fallthru
        _
    $region6: #{tpu_custom_call.1} parent=1 // loop_footer
      %s23 = sadd.s32 1, %s19
    $region7: #{tpu_custom_call.1} parent=1 // loop_footer_branch
      %18 = sbr.rel target = $region3
    $region8: #{tpu_custom_call.1} parent=1 // loop_exit
      _
    %313 = vsyncpa [#allocation4], 1
    %s314 = scalar_lea.sflag [#allocation4], 1
    %315 = vsyncpa %s314, 1
    %316 = vsyncpa [#allocation7], 1
    %s317 = scalar_lea.sflag [#allocation7], 1
    %318 = vsyncpa %s317, 1
    %319 = vsyncpa [#allocation5], 1
    %s320 = scalar_lea.sflag [#allocation5], 1
    %321 = vsyncpa %s320, 1

</llo_original>
